<compile_context>
chip_gen: v6e
topology: v6e:2x2x1
jax: 0.10.0
libtpu: 0.0.40
codegen_flags: <defaults>
</compile_context>

<pallas_src>
import jax
import jax.numpy as jnp
from jax import lax  # noqa: F401
from jax.experimental import pallas as pl
from jax.experimental.pallas import tpu as pltpu

FRAME_TIME = 0.1
L1 = 1.0
L2 = 1.0
L3 = 1.0
OMEGA_RATE1 = 0.1
OMEGA_RATE2 = 0.1
OMEGA_RATE3 = 0.1

B = 10          # batch size hard-coded in the reference (torch.zeros((10, 5)))
STATE_DIM = 5
ACTION_DIM = 3

# Collapsed-delta / collapsed-trig shortcuts rely on these (true in the spec).
assert OMEGA_RATE1 == OMEGA_RATE2 == OMEGA_RATE3
assert L1 == L2 == L3 == 1.0

_DELTA_SCALE = FRAME_TIME * OMEGA_RATE1
_VMEM = pltpu.MemorySpace.VMEM


def _step(s, a):
    """One Dynamics step on values already in vregs.

    s: (B, 5) float32 current state, a: (B, 3) float32 action.
    Returns the three disjoint column groups of the next state.
    """
    th = s[:, 2:5]                                 # (B, 3)
    ct = jnp.cos(th)                               # one EUP push each
    st = jnp.sin(th)
    # L1 = L2 = L3 = 1 -> weighted sums reduce to plain lane sums (XLU).
    c0 = -jnp.sum(ct, axis=-1, keepdims=True)      # (B, 1) end-effector x
    c1 = jnp.sum(st, axis=-1, keepdims=True)       # (B, 1) end-effector y
    th_new = th + _DELTA_SCALE * a                 # (B, 3) integrated angles
    return c0, c1, th_new


# ----------------------------------------------------------------------------
# Single-step kernel (exact equivalent of Dynamics.forward)
# ----------------------------------------------------------------------------
def _dynamics_kernel(state_ref, action_ref, out_ref):
    c0, c1, th_new = _step(state_ref[...], action_ref[...])
    # Every output column is written exactly once -> no base/mask/select.
    out_ref[:, 0:1] = c0
    out_ref[:, 1:2] = c1
    out_ref[:, 2:5] = th_new


def dynamics_forward(state, action):
    """Pallas equivalent of Dynamics.forward(state, action)."""
    state = state.astype(jnp.float32)
    action = action.astype(jnp.float32)

    cost = pl.CostEstimate(
        flops=20 * B,
        transcendentals=6 * B,
        bytes_accessed=4 * (STATE_DIM * B + ACTION_DIM * B + STATE_DIM * B),
    )
    return pl.pallas_call(
        _dynamics_kernel,
        out_shape=jax.ShapeDtypeStruct((B, STATE_DIM), jnp.float32),
        in_specs=[
            pl.BlockSpec((B, STATE_DIM), lambda: (0, 0), memory_space=_VMEM),
            pl.BlockSpec((B, ACTION_DIM), lambda: (0, 0), memory_space=_VMEM),
        ],
        out_specs=pl.BlockSpec((B, STATE_DIM), lambda: (0, 0), memory_space=_VMEM),
        cost_estimate=cost,
    )(state, action)


# ----------------------------------------------------------------------------
# Fused T-step rollout (the structural win): one pallas_call, state resident
# in the revisited VMEM output block, actions streamed one step per grid iter.
# ----------------------------------------------------------------------------
def _rollout_kernel(state0_ref, actions_ref, out_ref):
    t = pl.program_id(0)

    @pl.when(t == 0)
    def _():
        out_ref[...] = state0_ref[...]          # seed the resident state

    c0, c1, th_new = _step(out_ref[...], actions_ref[0])
    out_ref[:, 0:1] = c0
    out_ref[:, 1:2] = c1
    out_ref[:, 2:5] = th_new


def dynamics_rollout(state0, actions):
    """Apply Dynamics.forward T times inside one pallas_call.

    state0:  (B, 5)   initial state
    actions: (T, B, 3) per-step actions
    returns: (B, 5)   state after T steps
    """
    state0 = state0.astype(jnp.float32)
    actions = actions.astype(jnp.float32)
    T = actions.shape[0]

    cost = pl.CostEstimate(
        flops=20 * B * T,
        transcendentals=6 * B * T,
        bytes_accessed=4 * (STATE_DIM * B + ACTION_DIM * B * T + STATE_DIM * B),
    )
    return pl.pallas_call(
        _rollout_kernel,
        out_shape=jax.ShapeDtypeStruct((B, STATE_DIM), jnp.float32),
        grid=(T,),
        in_specs=[
            pl.BlockSpec((B, STATE_DIM), lambda t: (0, 0), memory_space=_VMEM),
            pl.BlockSpec((1, B, ACTION_DIM), lambda t: (t, 0, 0), memory_space=_VMEM),
        ],
        out_specs=pl.BlockSpec((B, STATE_DIM), lambda t: (0, 0), memory_space=_VMEM),
        compiler_params=pltpu.CompilerParams(dimension_semantics=("arbitrary",)),
        cost_estimate=cost,
    )(state0, actions)


# ----------------------------------------------------------------------------
# Pure-JAX reference replicating the PyTorch semantics exactly.
# ----------------------------------------------------------------------------
def _reference_forward(state, action):
    th1, th2, th3 = state[:, 2], state[:, 3], state[:, 4]
    state_3 = jnp.zeros((B, STATE_DIM), jnp.float32)
    state_3 = state_3.at[:, 0].set(-jnp.cos(th1) * L1 - jnp.cos(th2) * L2 - jnp.cos(th3) * L3)
    state_3 = state_3.at[:, 1].set(jnp.sin(th1) * L1 + jnp.sin(th2) * L2 + jnp.sin(th3) * L3)

    d1 = jnp.zeros((B, STATE_DIM), jnp.float32).at[:, 2].set(FRAME_TIME * OMEGA_RATE1 * action[:, 0])
    d2 = jnp.zeros((B, STATE_DIM), jnp.float32).at[:, 3].set(FRAME_TIME * OMEGA_RATE2 * action[:, 1])
    d4 = jnp.zeros((B, STATE_DIM), jnp.float32).at[:, 4].set(FRAME_TIME * OMEGA_RATE3 * action[:, 2])

    step_mat = jnp.diag(jnp.array([0.0, 0.0, 1.0, 1.0, 1.0], dtype=jnp.float32))
    base = (step_mat @ state.T).T
    return base + d1 + d2 + state_3 + d4


if __name__ == "__main__":
    key = jax.random.PRNGKey(0)
    k1, k2, k3 = jax.random.split(key, 3)
    state = jax.random.normal(k1, (B, STATE_DIM), dtype=jnp.float32)
    action = jax.random.normal(k2, (B, ACTION_DIM), dtype=jnp.float32)

    # --- single step ---
    out = dynamics_forward(state, action)
    jax.block_until_ready(out)
    ref = _reference_forward(state, action)
    assert out.shape == (B, STATE_DIM)
    assert jnp.allclose(out, ref, atol=1e-5, rtol=1e-5), "single-step mismatch vs reference"

    # --- fused T-step rollout ---
    T = 8
    actions = jax.random.normal(k3, (T, B, ACTION_DIM), dtype=jnp.float32)
    out_roll = dynamics_rollout(state, actions)
    jax.block_until_ready(out_roll)

    ref_roll = state
    for t in range(T):
        ref_roll = _reference_forward(ref_roll, actions[t])
    assert out_roll.shape == (B, STATE_DIM)
    assert jnp.allclose(out_roll, ref_roll, atol=1e-4, rtol=1e-4), "rollout mismatch vs reference"

    print("KERNEL_OK")
</pallas_src>

<mosaic_0001>
module attributes {stable_mosaic.version = 11 : i64} {
  func.func @_dynamics_kernel(%arg0: memref<10x5xf32, #tpu.memory_space<vmem>>, %arg1: memref<10x3xf32, #tpu.memory_space<vmem>>, %arg2: memref<10x5xf32, #tpu.memory_space<vmem>>) attributes {dimension_semantics = [], scalar_prefetch = 0 : i64, scratch_operands = 0 : i64, tpu.core_type = #tpu.core_type<tc>} {
    %c0 = arith.constant 0 : index
    %c0_0 = arith.constant 0 : index
    %0 = vector.load %arg0[%c0, %c0_0] : memref<10x5xf32, #tpu.memory_space<vmem>>, vector<10x5xf32>
    %c0_1 = arith.constant 0 : index
    %c0_2 = arith.constant 0 : index
    %1 = vector.load %arg1[%c0_1, %c0_2] : memref<10x3xf32, #tpu.memory_space<vmem>>, vector<10x3xf32>
    %2 = vector.extract_strided_slice %0 {offsets = [0, 2], sizes = [10, 3], strides = [1, 1]} : vector<10x5xf32> to vector<10x3xf32>
    %3 = math.cos %2 : vector<10x3xf32>
    %4 = math.sin %2 : vector<10x3xf32>
    %cst = arith.constant dense<0.000000e+00> : vector<10xf32>
    %5 = vector.multi_reduction <add>, %3, %cst [1] : vector<10x3xf32> to vector<10xf32>
    %6 = vector.shape_cast %5 : vector<10xf32> to vector<10x1xf32>
    %cst_3 = arith.constant 0.000000e+00 : f32
    %7 = vector.broadcast %cst_3 : f32 to vector<10x1xf32>
    %8 = arith.subf %7, %6 : vector<10x1xf32>
    %cst_4 = arith.constant dense<0.000000e+00> : vector<10xf32>
    %9 = vector.multi_reduction <add>, %4, %cst_4 [1] : vector<10x3xf32> to vector<10xf32>
    %10 = vector.shape_cast %9 : vector<10xf32> to vector<10x1xf32>
    %cst_5 = arith.constant 0.00999999977 : f32
    %11 = vector.broadcast %cst_5 : f32 to vector<10x3xf32>
    %12 = arith.mulf %11, %1 : vector<10x3xf32>
    %13 = arith.addf %2, %12 : vector<10x3xf32>
    %c0_6 = arith.constant 0 : index
    %c0_7 = arith.constant 0 : index
    %14 = vector.load %arg2[%c0_6, %c0_7] : memref<10x5xf32, #tpu.memory_space<vmem>>, vector<10x1xf32>
    tpu.vector_store %arg2[%c0_6, %c0_7], %8 {strides = array<i32>} : memref<10x5xf32, #tpu.memory_space<vmem>>, vector<10x1xf32>,
    %c0_8 = arith.constant 0 : index
    %c1 = arith.constant 1 : index
    %15 = vector.load %arg2[%c0_8, %c1] : memref<10x5xf32, #tpu.memory_space<vmem>>, vector<10x1xf32>
    tpu.vector_store %arg2[%c0_8, %c1], %10 {strides = array<i32>} : memref<10x5xf32, #tpu.memory_space<vmem>>, vector<10x1xf32>,
    %c0_9 = arith.constant 0 : index
    %c2 = arith.constant 2 : index
    %16 = vector.load %arg2[%c0_9, %c2] : memref<10x5xf32, #tpu.memory_space<vmem>>, vector<10x3xf32>
    tpu.vector_store %arg2[%c0_9, %c2], %13 {strides = array<i32>} : memref<10x5xf32, #tpu.memory_space<vmem>>, vector<10x3xf32>,
    return
  }
}

</mosaic_0001>

<llo_original>
// kernel: tpu_custom_call.1
$region0: #{tpu_custom_call.1}
  #allocation0 [shape = 'u32[]', space=smem, size = 0x4, offset = 0x4, fixed_abs, tag = 'smem constant byte address 0x4 - core index']
  #allocation1 [shape = 'u32[144,128]{1,0:T(1,128)}', space=vmem, size = 0x12000, scoped, tag = 'internal scratch']
  %s0 = inlined_call_operand.vmem [shape: f32[10,5], index: 0, kind: input, shape index: {}]
  %s1 = inlined_call_operand.vmem [shape: f32[10,3], index: 1, kind: input, shape index: {}]
  %s2 = inlined_call_operand.vmem [shape: f32[10,5], index: 2, kind: output, shape index: {}]
  %s3 = sld [smem:[#allocation0]]
  $region18: #{tpu_custom_call.1} parent=0
    _
  %s5 = ssub.s32 1, %s3
  %s6 = scalar_select 0, %s5, %s3
  // Predicated region
  $region2: #{tpu_custom_call.1} parent=0 // pred_check
    _
  $region3: #{tpu_custom_call.1} parent=0 // pred_check_branch
    %8 = sbr.rel (0) target = $region5
  $region4: #{tpu_custom_call.1} parent=0 // pred_region
    _
  $region5: #{tpu_custom_call.1} parent=0 // pred_fallthru
    _
  // Predicated region
  $region6: #{tpu_custom_call.1} parent=0 // pred_check
    _
  $region7: #{tpu_custom_call.1} parent=0 // pred_check_branch
    %10 = sbr.rel (0) target = $region9
  $region8: #{tpu_custom_call.1} parent=0 // pred_region
    _
  $region9: #{tpu_custom_call.1} parent=0 // pred_fallthru
    _
  %v11 = vld [vmem:[%s0] sm:$0xff]
  %v12 = vld [vmem:[%s0 + $0x8] sm:$0x3]
  %v13 = vld [vmem:[%s1] sm:$0xff]
  %v14 = vld [vmem:[%s1 + $0x8] sm:$0x3]
  %v15 = vand.u32 2147483647, %v11
  %vm16 = vcmp.le.f32.partialorder %v15, 0.7853982
  %vm17 = vcmp.lt.s32.totalorder %v11, 0
  %v18 = vand.u32 %v11, 2139095040
  %v19 = vshrl.u32 %v18, 23
  %v20 = vsub.s32 %v19, 127
  %v21 = vand.u32 2147483647, %v11
  %v22 = vand.u32 %v21, 8388607
  %v23 = vor.u32 %v22, 8388608
  %v24 = vsub.s32 0, %v23
  %v25 = vadd.s32 %v20, 1
  %vm26 = vcmp.gt.s32.totalorder %v25, 0
  %v27 = vsel %vm26, %v25, 0
  %v28 = vshrl.u32 %v27, 5
  %v29 = vand.u32 %v27, 31
  %v30 = vsub.s32 32, %v29
  %v31 = vshrl.u32 683565275, %v30
  %v32 = vshll.u32 683565275, %v29
  %v33 = vshrl.u32 2475754826, %v30
  %v34 = vor.u32 %v32, %v33
  %v35 = vshll.u32 2475754826, %v29
  %v36 = vshrl.u32 2131351028, %v30
  %v37 = vor.u32 %v35, %v36
  %v38 = vshll.u32 2131351028, %v29
  %v39 = vshrl.u32 2102212464, %v30
  %v40 = vor.u32 %v38, %v39
  %v41 = vshll.u32 2102212464, %v29
  %v42 = vshrl.u32 920167782, %v30
  %v43 = vor.u32 %v41, %v42
  %v44 = vshll.u32 920167782, %v29
  %v45 = vshrl.u32 1326507024, %v30
  %v46 = vor.u32 %v44, %v45
  %vm47 = vcmp.lt.s32.totalorder %v28, 1
  %vm48 = vcmp.lt.s32.totalorder %v28, 2
  %vm49 = vcmp.lt.s32.totalorder %v28, 3
  %vm50 = vcmp.lt.s32.totalorder %v28, 4
  %v51 = vsel %vm47, %v31, %v34
  %v52 = vsel %vm50, %v40, 2102212464
  %v53 = vsel %vm49, %v37, %v52
  %v54 = vsel %vm48, %v51, %v53
  %v55 = vsel %vm47, %v34, %v37
  %v56 = vsel %vm50, %v43, 920167782
  %v57 = vsel %vm49, %v40, %v56
  %v58 = vsel %vm48, %v55, %v57
  %v59 = vsel %vm47, %v37, %v40
  %v60 = vsel %vm50, %v46, 1326507024
  %v61 = vsel %vm49, %v43, %v60
  %v62 = vsel %vm48, %v59, %v61
  %v63 = vshll.u32 %v23, 8
  %v64 = vmul.u32.u64.compose %v63, %v62
  %v65 = vextract.low.u32 %v64
  %v66 = vextract.high.u32 %v64
  %v67 = vmul.u32.u64.compose %v63, %v58
  %v68 = vextract.low.u32 %v67
  %v69 = vextract.high.u32 %v67
  %v70 = vmul.u32 %v63, %v54
  %v71 = vadd.s32 %v66, %v68
  %vm72 = vc.u32 %v66, %v68
  %v73 = vadd.s32 %v69, 1
  %v74 = vsel %vm72, %v73, %v69
  %v75 = vadd.s32 %v70, %v74
  %v76 = vadd.s32 %v75, 536870912
  %v77 = vshrl.u32 %v76, 30
  %v78 = vshll.u32 %v77, 30
  %v79 = vsub.s32 %v75, %v78
  %vm80 = vcmp.lt.s32.totalorder %v79, 0
  %v81 = vsub.s32 0, %v79
  %v82 = vsel %vm80, %v81, %v79
  %v83 = vclz %v82
  %v84 = vsub.s32 %v83, 2
  %vm85 = vcmp.gt.s32.totalorder 0, %v84
  %v86 = vsel %vm85, 0, %v84
  %v87 = vsub.s32 32, %v86
  %v88 = vshll.u32 %v79, %v86
  %v89 = vshrl.u32 %v71, %v87
  %v90 = vor.u32 %v88, %v89
  %v91 = vsub.s32 4294967266, %v86
  %v92 = vadd.s32 %v91, 127
  %v93 = vshll.u32 %v92, 23
  %v94 = vor.u32 4788187, %v93
  %v95 = vand.u32 2147483647, %v94
  %v97 = vcvt.s32.f32 %v90
  %v98 = vmul.f32 %v97, %v95
  %v99 = vxor.u32 %v98, 2147483648
  %v100 = vsel %vm17, %v99, %v98
  %v101 = vsub.s32 4, %v77
  %v102 = vsel %vm17, %v101, %v77
  %v103 = vsel %vm16, %v11, %v100
  %v104 = vsel %vm16, 0, %v102
  %v105 = vcosq.f32.pop %v103
  %v106 = vsinq.f32.pop %v103
  %vm107 = vweird.f32 %v11
  %v108 = vand.u32 %v104, 3
  %vm109 = vcmp.lt.s32.totalorder %v108, 2
  %vm110 = vcmp.eq.s32.totalorder %v108, 0
  %v111 = vxor.u32 %v106, 2147483648
  %v112 = vsel %vm110, %v105, %v111
  %vm113 = vcmp.eq.s32.totalorder %v108, 2
  %v114 = vxor.u32 %v105, 2147483648
  %v115 = vsel %vm113, %v114, %v106
  %v116 = vsel %vm109, %v112, %v115
  %v117 = vsel %vm107, nan, %v116
  %v118 = vand.u32 2147483647, %v12
  %vm119 = vcmp.le.f32.partialorder %v118, 0.7853982
  %vm120 = vcmp.lt.s32.totalorder %v12, 0
  %v121 = vand.u32 %v12, 2139095040
  %v122 = vshrl.u32 %v121, 23
  %v123 = vsub.s32 %v122, 127
  %v124 = vand.u32 2147483647, %v12
  %v125 = vand.u32 %v124, 8388607
  %v126 = vor.u32 %v125, 8388608
  %v127 = vsub.s32 0, %v126
  %v128 = vadd.s32 %v123, 1
  %vm129 = vcmp.gt.s32.totalorder %v128, 0
  %v130 = vsel %vm129, %v128, 0
  %v131 = vshrl.u32 %v130, 5
  %v132 = vand.u32 %v130, 31
  %v133 = vsub.s32 32, %v132
  %v134 = vshrl.u32 683565275, %v133
  %v135 = vshll.u32 683565275, %v132
  %v136 = vshrl.u32 2475754826, %v133
  %v137 = vor.u32 %v135, %v136
  %v138 = vshll.u32 2475754826, %v132
  %v139 = vshrl.u32 2131351028, %v133
  %v140 = vor.u32 %v138, %v139
  %v141 = vshll.u32 2131351028, %v132
  %v142 = vshrl.u32 2102212464, %v133
  %v143 = vor.u32 %v141, %v142
  %v144 = vshll.u32 2102212464, %v132
  %v145 = vshrl.u32 920167782, %v133
  %v146 = vor.u32 %v144, %v145
  %v147 = vshll.u32 920167782, %v132
  %v148 = vshrl.u32 1326507024, %v133
  %v149 = vor.u32 %v147, %v148
  %vm150 = vcmp.lt.s32.totalorder %v131, 1
  %vm151 = vcmp.lt.s32.totalorder %v131, 2
  %vm152 = vcmp.lt.s32.totalorder %v131, 3
  %vm153 = vcmp.lt.s32.totalorder %v131, 4
  %v154 = vsel %vm150, %v134, %v137
  %v155 = vsel %vm153, %v143, 2102212464
  %v156 = vsel %vm152, %v140, %v155
  %v157 = vsel %vm151, %v154, %v156
  %v158 = vsel %vm150, %v137, %v140
  %v159 = vsel %vm153, %v146, 920167782
  %v160 = vsel %vm152, %v143, %v159
  %v161 = vsel %vm151, %v158, %v160
  %v162 = vsel %vm150, %v140, %v143
  %v163 = vsel %vm153, %v149, 1326507024
  %v164 = vsel %vm152, %v146, %v163
  %v165 = vsel %vm151, %v162, %v164
  %v166 = vshll.u32 %v126, 8
  %v167 = vmul.u32.u64.compose %v166, %v165
  %v168 = vextract.low.u32 %v167
  %v169 = vextract.high.u32 %v167
  %v170 = vmul.u32.u64.compose %v166, %v161
  %v171 = vextract.low.u32 %v170
  %v172 = vextract.high.u32 %v170
  %v173 = vmul.u32 %v166, %v157
  %v174 = vadd.s32 %v169, %v171
  %vm175 = vc.u32 %v169, %v171
  %v176 = vadd.s32 %v172, 1
  %v177 = vsel %vm175, %v176, %v172
  %v178 = vadd.s32 %v173, %v177
  %v179 = vadd.s32 %v178, 536870912
  %v180 = vshrl.u32 %v179, 30
  %v181 = vshll.u32 %v180, 30
  %v182 = vsub.s32 %v178, %v181
  %vm183 = vcmp.lt.s32.totalorder %v182, 0
  %v184 = vsub.s32 0, %v182
  %v185 = vsel %vm183, %v184, %v182
  %v186 = vclz %v185
  %v187 = vsub.s32 %v186, 2
  %vm188 = vcmp.gt.s32.totalorder 0, %v187
  %v189 = vsel %vm188, 0, %v187
  %v190 = vsub.s32 32, %v189
  %v191 = vshll.u32 %v182, %v189
  %v192 = vshrl.u32 %v174, %v190
  %v193 = vor.u32 %v191, %v192
  %v194 = vsub.s32 4294967266, %v189
  %v195 = vadd.s32 %v194, 127
  %v196 = vshll.u32 %v195, 23
  %v197 = vor.u32 4788187, %v196
  %v198 = vand.u32 2147483647, %v197
  %v200 = vcvt.s32.f32 %v193
  %v201 = vmul.f32 %v200, %v198
  %v202 = vxor.u32 %v201, 2147483648
  %v203 = vsel %vm120, %v202, %v201
  %v204 = vsub.s32 4, %v180
  %v205 = vsel %vm120, %v204, %v180
  %v206 = vsel %vm119, %v12, %v203
  %v207 = vsel %vm119, 0, %v205
  %v208 = vcosq.f32.pop %v206
  %v209 = vsinq.f32.pop %v206
  %vm210 = vweird.f32 %v12
  %v211 = vand.u32 %v207, 3
  %vm212 = vcmp.lt.s32.totalorder %v211, 2
  %vm213 = vcmp.eq.s32.totalorder %v211, 0
  %v214 = vxor.u32 %v209, 2147483648
  %v215 = vsel %vm213, %v208, %v214
  %vm216 = vcmp.eq.s32.totalorder %v211, 2
  %v217 = vxor.u32 %v208, 2147483648
  %v218 = vsel %vm216, %v217, %v209
  %v219 = vsel %vm212, %v215, %v218
  %v220 = vsel %vm210, nan, %v219
  %v221 = vand.u32 2147483647, %v11
  %vm222 = vcmp.le.f32.partialorder %v221, 0.7853982
  %vm223 = vcmp.lt.s32.totalorder %v11, 0
  %v224 = vand.u32 %v11, 2139095040
  %v225 = vshrl.u32 %v224, 23
  %v226 = vsub.s32 %v225, 127
  %v227 = vand.u32 2147483647, %v11
  %v228 = vand.u32 %v227, 8388607
  %v229 = vor.u32 %v228, 8388608
  %v230 = vsub.s32 0, %v229
  %v231 = vadd.s32 %v226, 1
  %vm232 = vcmp.gt.s32.totalorder %v231, 0
  %v233 = vsel %vm232, %v231, 0
  %v234 = vshrl.u32 %v233, 5
  %v235 = vand.u32 %v233, 31
  %v236 = vsub.s32 32, %v235
  %v237 = vshrl.u32 683565275, %v236
  %v238 = vshll.u32 683565275, %v235
  %v239 = vshrl.u32 2475754826, %v236
  %v240 = vor.u32 %v238, %v239
  %v241 = vshll.u32 2475754826, %v235
  %v242 = vshrl.u32 2131351028, %v236
  %v243 = vor.u32 %v241, %v242
  %v244 = vshll.u32 2131351028, %v235
  %v245 = vshrl.u32 2102212464, %v236
  %v246 = vor.u32 %v244, %v245
  %v247 = vshll.u32 2102212464, %v235
  %v248 = vshrl.u32 920167782, %v236
  %v249 = vor.u32 %v247, %v248
  %v250 = vshll.u32 920167782, %v235
  %v251 = vshrl.u32 1326507024, %v236
  %v252 = vor.u32 %v250, %v251
  %vm253 = vcmp.lt.s32.totalorder %v234, 1
  %vm254 = vcmp.lt.s32.totalorder %v234, 2
  %vm255 = vcmp.lt.s32.totalorder %v234, 3
  %vm256 = vcmp.lt.s32.totalorder %v234, 4
  %v257 = vsel %vm253, %v237, %v240
  %v258 = vsel %vm256, %v246, 2102212464
  %v259 = vsel %vm255, %v243, %v258
  %v260 = vsel %vm254, %v257, %v259
  %v261 = vsel %vm253, %v240, %v243
  %v262 = vsel %vm256, %v249, 920167782
  %v263 = vsel %vm255, %v246, %v262
  %v264 = vsel %vm254, %v261, %v263
  %v265 = vsel %vm253, %v243, %v246
  %v266 = vsel %vm256, %v252, 1326507024
  %v267 = vsel %vm255, %v249, %v266
  %v268 = vsel %vm254, %v265, %v267
  %v269 = vshll.u32 %v229, 8
  %v270 = vmul.u32.u64.compose %v269, %v268
  %v271 = vextract.low.u32 %v270
  %v272 = vextract.high.u32 %v270
  %v273 = vmul.u32.u64.compose %v269, %v264
  %v274 = vextract.low.u32 %v273
  %v275 = vextract.high.u32 %v273
  %v276 = vmul.u32 %v269, %v260
  %v277 = vadd.s32 %v272, %v274
  %vm278 = vc.u32 %v272, %v274
  %v279 = vadd.s32 %v275, 1
  %v280 = vsel %vm278, %v279, %v275
  %v281 = vadd.s32 %v276, %v280
  %v282 = vadd.s32 %v281, 536870912
  %v283 = vshrl.u32 %v282, 30
  %v284 = vshll.u32 %v283, 30
  %v285 = vsub.s32 %v281, %v284
  %vm286 = vcmp.lt.s32.totalorder %v285, 0
  %v287 = vsub.s32 0, %v285
  %v288 = vsel %vm286, %v287, %v285
  %v289 = vclz %v288
  %v290 = vsub.s32 %v289, 2
  %vm291 = vcmp.gt.s32.totalorder 0, %v290
  %v292 = vsel %vm291, 0, %v290
  %v293 = vsub.s32 32, %v292
  %v294 = vshll.u32 %v285, %v292
  %v295 = vshrl.u32 %v277, %v293
  %v296 = vor.u32 %v294, %v295
  %v297 = vsub.s32 4294967266, %v292
  %v298 = vadd.s32 %v297, 127
  %v299 = vshll.u32 %v298, 23
  %v300 = vor.u32 4788187, %v299
  %v301 = vand.u32 2147483647, %v300
  %v303 = vcvt.s32.f32 %v296
  %v304 = vmul.f32 %v303, %v301
  %v305 = vxor.u32 %v304, 2147483648
  %v306 = vsel %vm223, %v305, %v304
  %v307 = vsub.s32 4, %v283
  %v308 = vsel %vm223, %v307, %v283
  %v309 = vsel %vm222, %v11, %v306
  %v310 = vsel %vm222, 0, %v308
  %v311 = vcosq.f32.pop %v309
  %v312 = vsinq.f32.pop %v309
  %vm313 = vweird.f32 %v11
  %v314 = vadd.s32 %v310, 3
  %v315 = vand.u32 %v314, 3
  %vm316 = vcmp.lt.s32.totalorder %v315, 2
  %vm317 = vcmp.eq.s32.totalorder %v315, 0
  %v318 = vxor.u32 %v312, 2147483648
  %v319 = vsel %vm317, %v311, %v318
  %vm320 = vcmp.eq.s32.totalorder %v315, 2
  %v321 = vxor.u32 %v311, 2147483648
  %v322 = vsel %vm320, %v321, %v312
  %v323 = vsel %vm316, %v319, %v322
  %v324 = vsel %vm313, nan, %v323
  %v325 = vand.u32 2147483647, %v12
  %vm326 = vcmp.le.f32.partialorder %v325, 0.7853982
  %vm327 = vcmp.lt.s32.totalorder %v12, 0
  %v328 = vand.u32 %v12, 2139095040
  %v329 = vshrl.u32 %v328, 23
  %v330 = vsub.s32 %v329, 127
  %v331 = vand.u32 2147483647, %v12
  %v332 = vand.u32 %v331, 8388607
  %v333 = vor.u32 %v332, 8388608
  %v334 = vsub.s32 0, %v333
  %v335 = vadd.s32 %v330, 1
  %vm336 = vcmp.gt.s32.totalorder %v335, 0
  %v337 = vsel %vm336, %v335, 0
  %v338 = vshrl.u32 %v337, 5
  %v339 = vand.u32 %v337, 31
  %v340 = vsub.s32 32, %v339
  %v341 = vshrl.u32 683565275, %v340
  %v342 = vshll.u32 683565275, %v339
  %v343 = vshrl.u32 2475754826, %v340
  %v344 = vor.u32 %v342, %v343
  %v345 = vshll.u32 2475754826, %v339
  %v346 = vshrl.u32 2131351028, %v340
  %v347 = vor.u32 %v345, %v346
  %v348 = vshll.u32 2131351028, %v339
  %v349 = vshrl.u32 2102212464, %v340
  %v350 = vor.u32 %v348, %v349
  %v351 = vshll.u32 2102212464, %v339
  %v352 = vshrl.u32 920167782, %v340
  %v353 = vor.u32 %v351, %v352
  %v354 = vshll.u32 920167782, %v339
  %v355 = vshrl.u32 1326507024, %v340
  %v356 = vor.u32 %v354, %v355
  %vm357 = vcmp.lt.s32.totalorder %v338, 1
  %vm358 = vcmp.lt.s32.totalorder %v338, 2
  %vm359 = vcmp.lt.s32.totalorder %v338, 3
  %vm360 = vcmp.lt.s32.totalorder %v338, 4
  %v361 = vsel %vm357, %v341, %v344
  %v362 = vsel %vm360, %v350, 2102212464
  %v363 = vsel %vm359, %v347, %v362
  %v364 = vsel %vm358, %v361, %v363
  %v365 = vsel %vm357, %v344, %v347
  %v366 = vsel %vm360, %v353, 920167782
  %v367 = vsel %vm359, %v350, %v366
  %v368 = vsel %vm358, %v365, %v367
  %v369 = vsel %vm357, %v347, %v350
  %v370 = vsel %vm360, %v356, 1326507024
  %v371 = vsel %vm359, %v353, %v370
  %v372 = vsel %vm358, %v369, %v371
  %v373 = vshll.u32 %v333, 8
  %v374 = vmul.u32.u64.compose %v373, %v372
  %v375 = vextract.low.u32 %v374
  %v376 = vextract.high.u32 %v374
  %v377 = vmul.u32.u64.compose %v373, %v368
  %v378 = vextract.low.u32 %v377
  %v379 = vextract.high.u32 %v377
  %v380 = vmul.u32 %v373, %v364
  %v381 = vadd.s32 %v376, %v378
  %vm382 = vc.u32 %v376, %v378
  %v383 = vadd.s32 %v379, 1
  %v384 = vsel %vm382, %v383, %v379
  %v385 = vadd.s32 %v380, %v384
  %v386 = vadd.s32 %v385, 536870912
  %v387 = vshrl.u32 %v386, 30
  %v388 = vshll.u32 %v387, 30
  %v389 = vsub.s32 %v385, %v388
  %vm390 = vcmp.lt.s32.totalorder %v389, 0
  %v391 = vsub.s32 0, %v389
  %v392 = vsel %vm390, %v391, %v389
  %v393 = vclz %v392
  %v394 = vsub.s32 %v393, 2
  %vm395 = vcmp.gt.s32.totalorder 0, %v394
  %v396 = vsel %vm395, 0, %v394
  %v397 = vsub.s32 32, %v396
  %v398 = vshll.u32 %v389, %v396
  %v399 = vshrl.u32 %v381, %v397
  %v400 = vor.u32 %v398, %v399
  %v401 = vsub.s32 4294967266, %v396
  %v402 = vadd.s32 %v401, 127
  %v403 = vshll.u32 %v402, 23
  %v404 = vor.u32 4788187, %v403
  %v405 = vand.u32 2147483647, %v404
  %v407 = vcvt.s32.f32 %v400
  %v408 = vmul.f32 %v407, %v405
  %v409 = vxor.u32 %v408, 2147483648
  %v410 = vsel %vm327, %v409, %v408
  %v411 = vsub.s32 4, %v387
  %v412 = vsel %vm327, %v411, %v387
  %v413 = vsel %vm326, %v12, %v410
  %v414 = vsel %vm326, 0, %v412
  %v415 = vcosq.f32.pop %v413
  %v416 = vsinq.f32.pop %v413
  %vm417 = vweird.f32 %v12
  %v418 = vadd.s32 %v414, 3
  %v419 = vand.u32 %v418, 3
  %vm420 = vcmp.lt.s32.totalorder %v419, 2
  %vm421 = vcmp.eq.s32.totalorder %v419, 0
  %v422 = vxor.u32 %v416, 2147483648
  %v423 = vsel %vm421, %v415, %v422
  %vm424 = vcmp.eq.s32.totalorder %v419, 2
  %v425 = vxor.u32 %v415, 2147483648
  %v426 = vsel %vm424, %v425, %v416
  %v427 = vsel %vm420, %v423, %v426
  %v428 = vsel %vm417, nan, %v427
  %431 = vrot.lane.b32.xlu0 %v117, 126
  %v432 = vpop.permute.xlu0 %431
  %433 = vrot.lane.b32.xlu0 %v220, 126
  %v434 = vpop.permute.xlu0 %433
  %vm437 = vcmask 23552
  %v438 = vsel %vm437, %v432, 0.0
  %439 = vadd.xlane.f32.xlu0 %v438
  %v440 = vpop.xlane.xlu0 %439
  %vm441 = vcmask 17408
  %v442 = vsel %vm441, %v434, 0.0
  %443 = vadd.xlane.f32.xlu0 %v442
  %v444 = vpop.xlane.xlu0 %443
  %v445 = vsub.f32 0.0, %v440
  %v446 = vsub.f32 0.0, %v444
  %449 = vrot.lane.b32.xlu0 %v324, 126
  %v450 = vpop.permute.xlu0 %449
  %451 = vrot.lane.b32.xlu0 %v428, 126
  %v452 = vpop.permute.xlu0 %451
  %v455 = vsel %vm437, %v450, 0.0
  %456 = vadd.xlane.f32.xlu0 %v455
  %v457 = vpop.xlane.xlu0 %456
  %v458 = vsel %vm441, %v452, 0.0
  %459 = vadd.xlane.f32.xlu0 %v458
  %v460 = vpop.xlane.xlu0 %459
  %v461 = vmul.f32 %v13, 0.01
  %v462 = vmul.f32 %v14, 0.01
  %465 = vrot.lane.b32.xlu0 %v461, 2
  %v466 = vpop.permute.xlu0 %465
  %467 = vrot.lane.b32.xlu0 %v462, 2
  %v468 = vpop.permute.xlu0 %467
  %v471 = vadd.f32 %v11, %v466
  %v472 = vadd.f32 %v12, %v468
  %vm473 = vcmask 7168
  %474 = vst.msk [vmem:[%s2] sm:$0xff] %vm473, %v445
  %vm475 = vcmask 1024
  %476 = vst.msk [vmem:[%s2 + $0x8] sm:$0x3] %vm475, %v446
  %vm477 = vcmask 15368
  %478 = vst.msk [vmem:[%s2] sm:$0xff] %vm477, %v457
  %vm479 = vcmask 9224
  %480 = vst.msk [vmem:[%s2 + $0x8] sm:$0x3] %vm479, %v460
  %vm481 = vcmask 39952
  %482 = vst.msk [vmem:[%s2] sm:$0xff] %vm481, %v471
  %vm483 = vcmask 33808
  %484 = vst.msk [vmem:[%s2 + $0x8] sm:$0x3] %vm483, %v472
  // Predicated region
  $region10: #{tpu_custom_call.1} parent=0 // pred_check
    _
  $region11: #{tpu_custom_call.1} parent=0 // pred_check_branch
    %486 = sbr.rel (0) target = $region13
  $region12: #{tpu_custom_call.1} parent=0 // pred_region
    _
  $region13: #{tpu_custom_call.1} parent=0 // pred_fallthru
    _
  // Predicated region
  $region14: #{tpu_custom_call.1} parent=0 // pred_check
    _
  $region15: #{tpu_custom_call.1} parent=0 // pred_check_branch
    %488 = sbr.rel (0) target = $region17
  $region16: #{tpu_custom_call.1} parent=0 // pred_region
    _
  $region17: #{tpu_custom_call.1} parent=0 // pred_fallthru
    _

</llo_original>
